<compile_context>
chip_gen: v7x
topology: tpu7x:2x2x1
jax: 0.10.0
libtpu: 0.0.40
codegen_flags: <defaults>
</compile_context>

<pallas_src>
import functools

import jax
import jax.numpy as jnp
from jax.experimental import pallas as pl
from jax.experimental.pallas import tpu as pltpu

_MIB = 1024 * 1024


def _gram_kernel(x_ref, o_ref, acc_ref, *, scale: float, hw: int,
                 cast_bf16: bool, mask_needed: bool):
    """One (slab, batch, k-tile) grid step: accumulate X_tile @ X_tile^T."""
    b, k = pl.program_id(1), pl.program_id(2)
    nb, nk_per = pl.num_programs(1), pl.num_programs(2)

    # Zero the resident accumulator at the start of each slab's reduction.
    @pl.when(jnp.logical_and(b == 0, k == 0))
    def _():
        acc_ref[...] = jnp.zeros_like(acc_ref)

    x = x_ref[0]                                   # (C, TK) tile
    if cast_bf16 and x.dtype == jnp.float32:
        # Opt-in: feed the MXU bf16 (3-4x matmul throughput), keep f32 accum.
        x = x.astype(jnp.bfloat16)
    if mask_needed:
        # Zero lanes past the true spatial size HW (ragged last tile and any
        # phantom tile introduced by the dual-core slab split).  OOB block
        # contents are garbage, never zeros, so this select is mandatory.
        tk = x.shape[-1]
        g = pl.program_id(0) * nk_per + k          # unclamped global tile idx
        col = g * tk + jax.lax.broadcasted_iota(jnp.int32, x.shape, 1)
        x = jnp.where(col < hw, x, jnp.zeros_like(x))

    # X @ X^T without materializing a transposed copy: contract both operands
    # on their last (lane) dim; the MXU consumes the transposed operand directly.
    acc_ref[...] += jax.lax.dot_general(
        x, x,
        dimension_numbers=(((1,), (1,)), ((), ())),
        preferred_element_type=jnp.float32,
    )

    # Epilogue: scale (mean over batch) and write this slab's (C, C) block once.
    @pl.when(jnp.logical_and(b == nb - 1, k == nk_per - 1))
    def _():
        res = acc_ref[...]
        if scale != 1.0:
            res = res * scale
        o_ref[0] = res


def _tpu_vmem_capacity_bytes() -> int:
    """Physical VMEM per core; conservative fallback if the query fails."""
    try:
        cap = getattr(pltpu.get_tpu_info(), "vmem_capacity_bytes", None)
        if cap:
            return int(cap)
    except Exception:
        pass
    return 64 * _MIB  # v7x-sized fallback (smallest current generation)


def _plan_tiles(C: int, HW: int, in_itemsize: int, k_tile=None):
    """Pick (tk, nk, num_slabs, nk_per_slab, vmem_limit) from the VMEM budget."""
    cap = _tpu_vmem_capacity_bytes()
    # Double-buffered (C, TK) input stream budget, per generation:
    #   >=128 MiB physical (v5e/v6e) -> ~20 MiB; 64 MiB physical (v7x) -> ~14 MiB.
    input_budget = 20 * _MIB if cap >= 128 * _MIB else 14 * _MIB
    # Resident f32 accumulator + double-buffered f32 (C, C) output block.
    fixed = 3 * C * C * 4
    headroom = 4 * _MIB
    scoped_cap = min((cap * 3) // 4, 96 * _MIB)
    input_budget = min(input_budget, max(scoped_cap - fixed - headroom, _MIB // 2))

    if k_tile is not None:
        tk = max(128, (int(k_tile) // 128) * 128)
    else:
        tk = input_budget // max(1, 2 * C * in_itemsize)
        tk = max(128, (tk // 128) * 128)            # multiple of 128, at least 128
        tk = min(tk, pl.cdiv(HW, 128) * 128)        # never wider than spatial size
        if pl.cdiv(HW, tk) == 1 and HW > 128:
            # Prefer >= 2 K tiles so the "parallel" slab axis has work for both
            # v7x TensorCores; free on single-core chips.
            tk = pl.cdiv(pl.cdiv(HW, 2), 128) * 128

    nk = pl.cdiv(HW, tk)                            # real K tiles
    num_slabs = 2 if nk >= 2 else 1                 # dual-TC split of the K range
    nk_per = pl.cdiv(nk, num_slabs)

    vmem_need = fixed + 2 * C * tk * in_itemsize + headroom
    vmem_limit = int(min(max(vmem_need, 16 * _MIB), scoped_cap))
    return int(tk), int(nk), int(num_slabs), int(nk_per), vmem_limit


def gram_matrix(feature_map: jax.Array, size_average: bool = True, *,
                use_bf16_mxu: bool = False, k_tile=None) -> jax.Array:
    """Equivalent of GramMatrix.forward for an NCHW feature map."""
    B, C, H, W = feature_map.shape
    HW = H * W
    x = feature_map.reshape(B, C, HW)  # glue: flatten spatial dims

    in_itemsize = jnp.dtype(feature_map.dtype).itemsize
    tk, nk, num_slabs, nk_per, vmem_limit = _plan_tiles(C, HW, in_itemsize, k_tile)

    scale = (1.0 / B) if size_average else 1.0
    # Mask when the covered K range (incl. phantom tiles) exceeds the true HW.
    mask_needed = (num_slabs * nk_per * tk) != HW

    if num_slabs * nk_per > nk:
        # Phantom tiles (odd nk split over 2 slabs): wrap the block index so the
        # DMA stays in range; the in-kernel mask zeroes their contribution.
        def in_idx(c, b, k):
            return (b, 0, (c * nk_per + k) % nk)
    else:
        def in_idx(c, b, k):
            return (b, 0, c * nk_per + k)

    kernel = functools.partial(_gram_kernel, scale=scale, hw=HW,
                               cast_bf16=use_bf16_mxu, mask_needed=mask_needed)

    cost = pl.CostEstimate(
        flops=2 * B * C * C * HW,
        transcendentals=0,
        bytes_accessed=B * C * HW * in_itemsize + num_slabs * C * C * 4,
    )

    out = pl.pallas_call(
        kernel,
        out_shape=jax.ShapeDtypeStruct((num_slabs, C, C), jnp.float32),
        grid_spec=pltpu.PrefetchScalarGridSpec(
            num_scalar_prefetch=0,
            # slab axis is "parallel" (disjoint output blocks per slab);
            # batch and K tiles reduce into the slab's resident accumulator.
            grid=(num_slabs, B, nk_per),
            in_specs=[pl.BlockSpec((1, C, tk), in_idx)],
            out_specs=pl.BlockSpec((1, C, C), lambda c, b, k: (c, 0, 0)),
            scratch_shapes=[pltpu.VMEM((C, C), jnp.float32)],
        ),
        compiler_params=pltpu.CompilerParams(
            dimension_semantics=("parallel", "arbitrary", "arbitrary"),
            vmem_limit_bytes=vmem_limit,
        ),
        cost_estimate=cost,
    )(x)

    g = out[0] if num_slabs == 1 else jnp.sum(out, axis=0)
    return g.astype(feature_map.dtype)


def gram_matrix_ref(feature_map: jax.Array, size_average: bool = True) -> jax.Array:
    B, C, H, W = feature_map.shape
    x = feature_map.reshape(B, C, H * W)
    g = jnp.einsum("bcn,bdn->bcd", x, x)
    return g.mean(axis=0) if size_average else g.sum(axis=0)


if __name__ == "__main__":
    key = jax.random.PRNGKey(0)

    # Small shapes consistent with the module: NCHW feature map.
    B, C, H, W = 2, 4, 16, 16
    feature_map = jax.random.normal(key, (B, C, H, W), dtype=jnp.float32)

    # mean over batch (size_average=True); exercises the 2-slab K split.
    out = jax.block_until_ready(gram_matrix(feature_map, size_average=True))
    ref = gram_matrix_ref(feature_map, size_average=True)
    assert out.shape == (C, C), out.shape
    assert jnp.allclose(out, ref, atol=1e-4, rtol=1e-4)

    # sum over batch (size_average=False)
    out_sum = jax.block_until_ready(gram_matrix(feature_map, size_average=False))
    ref_sum = gram_matrix_ref(feature_map, size_average=False)
    assert jnp.allclose(out_sum, ref_sum, atol=1e-4, rtol=1e-4)

    # Non-128-multiple spatial size -> ragged-tile in-kernel mask (no padding);
    # odd channel count -> full-dim (C, C) output block.
    fm2 = jax.random.normal(jax.random.PRNGKey(1), (2, 6, 10, 10), dtype=jnp.float32)
    out2 = jax.block_until_ready(gram_matrix(fm2, size_average=True))
    ref2 = gram_matrix_ref(fm2, size_average=True)
    assert jnp.allclose(out2, ref2, atol=1e-4, rtol=1e-4)

    # Odd number of K tiles with the 2-slab split -> phantom-tile wrap + mask.
    fm3 = jax.random.normal(jax.random.PRNGKey(2), (2, 8, 19, 19), dtype=jnp.float32)
    out3 = jax.block_until_ready(gram_matrix(fm3, size_average=True, k_tile=128))
    ref3 = gram_matrix_ref(fm3, size_average=True)
    assert jnp.allclose(out3, ref3, atol=1e-2, rtol=1e-3)

    # bfloat16 input -> f32 scratch accumulation + cast back to bf16.
    fm_bf16 = feature_map.astype(jnp.bfloat16)
    out_bf16 = jax.block_until_ready(gram_matrix(fm_bf16, size_average=True))
    ref_bf16 = gram_matrix_ref(fm_bf16, size_average=True)
    assert out_bf16.dtype == jnp.bfloat16
    assert jnp.allclose(out_bf16.astype(jnp.float32),
                        ref_bf16.astype(jnp.float32), atol=1.0, rtol=5e-2)

    # Opt-in bf16 MXU feed for f32 inputs (compute-bound large-C lever).
    out_fast = jax.block_until_ready(
        gram_matrix(feature_map, size_average=True, use_bf16_mxu=True))
    assert jnp.allclose(out_fast, ref, atol=0.5, rtol=5e-2)

    print("KERNEL_OK")
</pallas_src>

<mosaic_0001>
module attributes {stable_mosaic.version = 11 : i64} {
  func.func @_gram_kernel(%arg0: i32, %arg1: i32, %arg2: i32, %arg3: memref<1x4x128xf32, #tpu.memory_space<vmem>>, %arg4: memref<1x4x4xf32, #tpu.memory_space<vmem>>, %arg5: memref<4x4xf32, #tpu.memory_space<vmem>>) attributes {dimension_semantics = [#tpu.dimension_semantics<parallel>, #tpu.dimension_semantics<arbitrary>, #tpu.dimension_semantics<arbitrary>], iteration_bounds = array<i64: 2, 2, 1>, scalar_prefetch = 0 : i64, scratch_operands = 1 : i64, tpu.core_type = #tpu.core_type<tc>, window_params = [{transform_indices = @transform_0, window_bounds = array<i64: 1, 4, 128>}, {transform_indices = @transform_1, window_bounds = array<i64: 1, 4, 4>}]} {
    %c0_i32 = arith.constant 0 : i32
    %0 = arith.cmpi eq, %arg1, %c0_i32 : i32
    %c0_i32_0 = arith.constant 0 : i32
    %1 = arith.cmpi eq, %arg2, %c0_i32_0 : i32
    %2 = arith.andi %0, %1 : i1
    %3 = arith.extui %2 : i1 to i32
    %c0_i32_1 = arith.constant 0 : i32
    %4 = arith.cmpi ne, %3, %c0_i32_1 : i32
    scf.if %4 {
      %cst_10 = arith.constant 0.000000e+00 : f32
      %16 = vector.broadcast %cst_10 : f32 to vector<4x4xf32>
      %c0_11 = arith.constant 0 : index
      %c0_12 = arith.constant 0 : index
      %17 = vector.load %arg5[%c0_11, %c0_12] : memref<4x4xf32, #tpu.memory_space<vmem>>, vector<4x4xf32>
      tpu.vector_store %arg5[%c0_11, %c0_12], %16 {strides = array<i32>} : memref<4x4xf32, #tpu.memory_space<vmem>>, vector<4x4xf32>,
    } else {
    }
    %c0 = arith.constant 0 : index
    %c0_2 = arith.constant 0 : index
    %c0_3 = arith.constant 0 : index
    %5 = vector.load %arg3[%c0, %c0_2, %c0_3] : memref<1x4x128xf32, #tpu.memory_space<vmem>>, vector<1x4x128xf32>
    %6 = vector.shape_cast %5 : vector<1x4x128xf32> to vector<4x128xf32>
    %c0_4 = arith.constant 0 : index
    %c0_5 = arith.constant 0 : index
    %7 = vector.load %arg5[%c0_4, %c0_5] : memref<4x4xf32, #tpu.memory_space<vmem>>, vector<4x4xf32>
    %cst = arith.constant dense<0.000000e+00> : vector<4x4xf32>
    %8 = tpu.matmul %6, %6, %cst {dimension_numbers = #tpu.dot_dimension_numbers<[1], [1], [0], [0], [0, 0, 1, 0], [], []>} : vector<4x128xf32>, vector<4x128xf32>, vector<4x4xf32> -> vector<4x4xf32>
    %9 = arith.addf %7, %8 : vector<4x4xf32>
    %c0_6 = arith.constant 0 : index
    %c0_7 = arith.constant 0 : index
    %10 = vector.load %arg5[%c0_6, %c0_7] : memref<4x4xf32, #tpu.memory_space<vmem>>, vector<4x4xf32>
    tpu.vector_store %arg5[%c0_6, %c0_7], %9 {strides = array<i32>} : memref<4x4xf32, #tpu.memory_space<vmem>>, vector<4x4xf32>,
    %c1_i32 = arith.constant 1 : i32
    %11 = arith.cmpi eq, %arg1, %c1_i32 : i32
    %c0_i32_8 = arith.constant 0 : i32
    %12 = arith.cmpi eq, %arg2, %c0_i32_8 : i32
    %13 = arith.andi %11, %12 : i1
    %14 = arith.extui %13 : i1 to i32
    %c0_i32_9 = arith.constant 0 : i32
    %15 = arith.cmpi ne, %14, %c0_i32_9 : i32
    scf.if %15 {
      %c0_10 = arith.constant 0 : index
      %c0_11 = arith.constant 0 : index
      %16 = vector.load %arg5[%c0_10, %c0_11] : memref<4x4xf32, #tpu.memory_space<vmem>>, vector<4x4xf32>
      %cst_12 = arith.constant 5.000000e-01 : f32
      %17 = vector.broadcast %cst_12 : f32 to vector<4x4xf32>
      %18 = arith.mulf %16, %17 : vector<4x4xf32>
      %c0_13 = arith.constant 0 : index
      %c0_14 = arith.constant 0 : index
      %c0_15 = arith.constant 0 : index
      %19 = vector.load %arg4[%c0_13, %c0_14, %c0_15] : memref<1x4x4xf32, #tpu.memory_space<vmem>>, vector<1x4x4xf32>
      %20 = vector.shape_cast %19 : vector<1x4x4xf32> to vector<4x4xf32>
      %21 = vector.shape_cast %18 : vector<4x4xf32> to vector<1x4x4xf32>
      tpu.vector_store %arg4[%c0_13, %c0_14, %c0_15], %21 {strides = array<i32>} : memref<1x4x4xf32, #tpu.memory_space<vmem>>, vector<1x4x4xf32>,
    } else {
    }
    return
  }
  func.func @transform_0(%arg0: i32, %arg1: i32, %arg2: i32) -> (i32, i32, i32) {
    %c1_i32 = arith.constant 1 : i32
    %0 = arith.muli %arg0, %c1_i32 : i32
    %1 = arith.addi %0, %arg2 : i32
    %c0_i32 = arith.constant 0 : i32
    %c0_i32_0 = arith.constant 0 : i32
    return %arg1, %c0_i32, %1 : i32, i32, i32
  }
  func.func @transform_1(%arg0: i32, %arg1: i32, %arg2: i32) -> (i32, i32, i32) {
    %c0_i32 = arith.constant 0 : i32
    %c0_i32_0 = arith.constant 0 : i32
    %c0_i32_1 = arith.constant 0 : i32
    return %arg0, %c0_i32, %c0_i32_0 : i32, i32, i32
  }
}

</mosaic_0001>

<llo_original>
// kernel: tpu_custom_call.1
$region0: #{tpu_custom_call.1}
  #allocation0 [shape = 'u32[]', space=smem, size = 0x4, offset = 0x4, fixed_abs, tag = 'smem constant byte address 0x4 - core index']
  #allocation1 [shape = 'u32[144,128]{1,0:T(1,128)}', space=vmem, size = 0x12000, scoped, tag = 'internal scratch']
  #allocation2 [shape = 'f32[4,4]{1,0:T(4,128)}', space=vmem, size = 0x800, scoped, tag = 'scratch operand']
  %s0 = inlined_call_operand.hbm [shape: f32[2,4,256], index: 0, kind: input, shape index: {}]
  %s1 = inlined_call_operand.hbm [shape: f32[2,4,4], index: 1, kind: output, shape index: {}]
  %s2 = sld [smem:[#allocation0]]
  $region49: #{tpu_custom_call.1} parent=0
    _
  %s4 = ssub.s32 1, %s2
  %s5 = scalar_select 0, %s4, %s2
  $region1: #{tpu_custom_call.1} parent=0
    #allocation3 [shape = 'u8[4096]{0}', space=vmem, size = 0x1000, scoped, tag = 'input window, operand 0']
    #allocation4 [shape = 's32[2]{0}', space=sflag, size = 0x8, scoped, tag = 'scoped memory for tpu_custom_call.1']
    #allocation5 [shape = 's32[2]{0}', space=sflag, size = 0x8, scoped, tag = 'scoped memory for tpu_custom_call.1']
    #allocation6 [shape = 'u8[4096]{0}', space=vmem, size = 0x1000, scoped, tag = 'output window, operand 0']
    %6 = vsyncpa [#allocation4], 0
    %s7 = scalar_lea.sflag [#allocation4], 1
    %8 = vsyncpa %s7, 0
    %9 = vsyncpa [#allocation5], 0
    %s10 = scalar_lea.sflag [#allocation5], 1
    %11 = vsyncpa %s10, 0
    loop: start=0, step=1, limit=6
    $region2: #{tpu_custom_call.1} parent=1 // loop_pre_header
      _
    $region3: #{tpu_custom_call.1} parent=1 // loop_header
      %s13 = sphi 0, %s17
      %p14 = scmp.ge.s32.totalorder %s13, 6
      %s20 = sphi 0, %s39
      %s21 = sphi 0, %s35
      %s22 = sphi 0, %s31
      %s23 = sphi 0, %s20
      %s24 = sphi 0, %s21
      %s25 = sphi 0, %s22
      %s26 = sphi 0, %s23
      %s27 = sphi 0, %s24
      %s28 = sphi 0, %s25
      %s46 = sphi 0, %s48
      %s49 = sphi 0, %s46
      %s50 = sphi 0, %s49
      %s66 = sphi 0, %s50
      %s72 = sphi 0, %s74
      %s75 = sphi 0, %s72
      %s76 = sphi 0, %s75
      %s92 = sphi 0, %s76
    $region4: #{tpu_custom_call.1} parent=1 // loop_header_branch
      %16 = sbr.rel (%p14) target = $region8
    $region5: #{tpu_custom_call.1} parent=1 // loop_body
      %s18 = ssub.s32 %s13, 1
      %s19 = ssub.s32 %s13, 2
      %s29 = sadd.s32 1, %s22
      %p30 = scmp.ge.s32.totalorder %s29, 1
      %s31 = scalar_select %p30, 0, %s29
      %s32 = sadd.s32 1, %s21
      %s33 = scalar_select %p30, %s32, %s21
      %p34 = scmp.ge.s32.totalorder %s33, 2
      %s35 = scalar_select %p34, 0, %s33
      %s36 = sadd.s32 1, %s20
      %s37 = scalar_select %p34, %s36, %s20
      %p38 = scmp.ge.s32.totalorder %s37, 2
      %s39 = scalar_select %p38, 0, %s37
      %s40 = sadd.s32 %s20, %s22
      %s41 = sadd.s32 %s39, %s31
      %s42 = ssub.s32 %s21, %s35
      %s43 = ssub.s32 %s40, %s41
      %s44 = sor.u32 %s42, %s43
      %p45 = scmp.eq.s32.totalorder %s44, 0
      %s47 = sadd.s32 %s46, 1
      %s48 = scalar_select %p45, %s46, %s47
      %p51 = pneg %p45
      %p52 = scmp.eq.s32.totalorder %s13, 3
      %p53 = por %p51, %p52
      %p54 = scmp.ne.s32.totalorder %s46, %s49
      %p55 = scmp.eq.s32.totalorder %s13, 0
      %p56 = por %p54, %p55
      %p57 = scmp.ne.s32.totalorder %s46, %s49
      %p58 = scmp.eq.s32.totalorder %s18, 3
      %p59 = por %p57, %p58
      %p60 = scmp.ne.s32.totalorder %s49, %s50
      %p61 = scmp.eq.s32.totalorder %s18, 0
      %p62 = por %p60, %p61
      %p63 = scmp.ne.s32.totalorder %s49, %s50
      %p64 = scmp.eq.s32.totalorder %s19, 3
      %p65 = por %p63, %p64
      %p67 = scmp.ne.s32.totalorder %s50, %s66
      %p68 = scmp.eq.s32.totalorder %s19, 0
      %p69 = por %p67, %p68
      %s70 = ssub.s32 %s20, %s39
      %p71 = scmp.eq.s32.totalorder %s70, 0
      %s73 = sadd.s32 %s72, 1
      %s74 = scalar_select %p71, %s72, %s73
      %p77 = pneg %p71
      %p78 = scmp.eq.s32.totalorder %s13, 3
      %p79 = por %p77, %p78
      %p80 = scmp.ne.s32.totalorder %s72, %s75
      %p81 = scmp.eq.s32.totalorder %s13, 0
      %p82 = por %p80, %p81
      %p83 = scmp.ne.s32.totalorder %s72, %s75
      %p84 = scmp.eq.s32.totalorder %s18, 3
      %p85 = por %p83, %p84
      %p86 = scmp.ne.s32.totalorder %s75, %s76
      %p87 = scmp.eq.s32.totalorder %s18, 0
      %p88 = por %p86, %p87
      %p89 = scmp.ne.s32.totalorder %s75, %s76
      %p90 = scmp.eq.s32.totalorder %s19, 3
      %p91 = por %p89, %p90
      %p93 = scmp.ne.s32.totalorder %s76, %s92
      %p94 = scmp.eq.s32.totalorder %s19, 0
      %p95 = por %p93, %p94
      %p96 = scmp.le.s32.totalorder 1, %s13
      %p97 = scmp.lt.s32.totalorder %s13, 5
      %p98 = pnand %p96, %p97
      %p99 = pneg %p98
      // Predicated region
      $region9: #{tpu_custom_call.1} parent=5 // pred_check
        _
      $region10: #{tpu_custom_call.1} parent=5 // pred_check_branch
        %101 = sbr.rel (%p98) target = $region12
      $region11: #{tpu_custom_call.1} parent=5 // pred_region
        %s102 = ssub.s32 %s13, 1
      $region12: #{tpu_custom_call.1} parent=5 // pred_fallthru
        _
      %p103 = scmp.lt.s32.totalorder %s13, 4
      // Predicated region
      $region13: #{tpu_custom_call.1} parent=5 // pred_check
        %p104 = pneg %p103
      $region14: #{tpu_custom_call.1} parent=5 // pred_check_branch
        %106 = sbr.rel (%p104) target = $region16
      $region15: #{tpu_custom_call.1} parent=5 // pred_region
        // Predicated region
        $region17: #{tpu_custom_call.1} parent=15 // pred_check
          %p107 = pneg %p56
        $region18: #{tpu_custom_call.1} parent=15 // pred_check_branch
          %109 = sbr.rel (%p107) target = $region20
        $region19: #{tpu_custom_call.1} parent=15 // pred_region
          %s110 = sand.u32 %s46, 1
          %s111 = scalar_lea.sflag [#allocation4], %s110
          %s112 = sand.u32 %s46, 1
          %s113 = smul.addr %s112, 4
          %s114 = scalar_lea.vmem [#allocation3], %s113
          %s115 = sadd.s32 %s20, %s22
          %s117 = ssub.s32 64, 64
          %118 = vsyncadd %s111, %s117
          %s119 = smul.addr %s21, 2
          %s120 = sadd.s32 %s115, %s119
          %s121 = smul.addr %s120, 64
          %s122 = scalar_lea.hbm %s0, %s121
          %s124 = sshll.u32 %s114, 4
          %s125 = int_to_ptr.vmem [resolvable:$true] %s124
          %127 = dma.hbm_to_vmem [thread:$0]  %s122, 64, %s125, %s111
        $region20: #{tpu_custom_call.1} parent=15 // pred_fallthru
          _
      $region16: #{tpu_custom_call.1} parent=5 // pred_fallthru
        _
      %p128 = scmp.le.s32.totalorder 1, %s13
      %p129 = scmp.lt.s32.totalorder %s13, 5
      %p130 = pnand %p128, %p129
      %p131 = pneg %p130
      // Predicated region
      $region21: #{tpu_custom_call.1} parent=5 // pred_check
        _
      $region22: #{tpu_custom_call.1} parent=5 // pred_check_branch
        %133 = sbr.rel (%p130) target = $region24
      $region23: #{tpu_custom_call.1} parent=5 // pred_region
        %s134 = ssub.s32 %s13, 1
        %s135 = sand.u32 %s49, 1
        %s136 = scalar_lea.sflag [#allocation4], %s135
        %s137 = sand.u32 %s49, 1
        %s138 = smul.addr %s137, 4
        %s139 = scalar_lea.vmem [#allocation3], %s138
        // Predicated region
        $region25: #{tpu_custom_call.1} parent=23 // pred_check
          %p140 = pneg %p62
        $region26: #{tpu_custom_call.1} parent=23 // pred_check_branch
          %142 = sbr.rel (%p140) target = $region28
        $region27: #{tpu_custom_call.1} parent=23 // pred_region
          %143 = dma.done %s136, 64
        $region28: #{tpu_custom_call.1} parent=23 // pred_fallthru
          _
        %s144 = sand.u32 %s49, 1
        %s145 = scalar_lea.sflag [#allocation4], %s144
        %s146 = sand.u32 %s49, 1
        %s147 = smul.addr %s146, 4
        %s148 = scalar_lea.vmem [#allocation3], %s147
        %p149 = pneg %p62
        %p150 = pneg %p59
        %p151 = pneg %p88
        %p152 = pneg %p85
        %s153 = sand.u32 %s75, 1
        %s154 = scalar_lea.sflag [#allocation5], %s153
        %s155 = sand.u32 %s75, 1
        %s156 = smul.addr %s155, 4
        %s157 = scalar_lea.vmem [#allocation6], %s156
        %s158 = sadd.s32 %s23, %s25
        %p159 = scmp.eq.s32.totalorder %s24, 0
        %p160 = scmp.eq.s32.totalorder %s25, 0
        %p161 = pnand %p159, %p160
        %p162 = pneg %p161
        // Predicated region
        $region29: #{tpu_custom_call.1} parent=23 // pred_check
          _
        $region30: #{tpu_custom_call.1} parent=23 // pred_check_branch
          %164 = sbr.rel (%p161) target = $region32
        $region31: #{tpu_custom_call.1} parent=23 // pred_region
          %vm165 = vcmask 27648
          %166 = vst.msk [vmem:[#allocation2] sm:$0xf] %vm165, 0.0
        $region32: #{tpu_custom_call.1} parent=23 // pred_fallthru
          _
        %v167 = vld [vmem:[%s139] sm:$0xf]
        %v168 = vld [vmem:[#allocation2] sm:$0xf]
        %169 = vmatprep.subr.mxu0 0.0
        %170 = vmatpush1.xpose.msra.mxu0 %v167
        %171 = vmatprep.subr.mxu0 0.0
        %172 = vmatpush1.xpose.msra.mxu0 0.0
        %173 = vmatprep.subr.mxu0 0.0
        %174 = vmatpush1.xpose.msra.mxu0 0.0
        %175 = vmatprep.subr.mxu0 0.0
        %176 = vmatpush1.xpose.msra.mxu0 0.0
        %177 = vmatprep.subr.mxu0 0.0
        %178 = vmatpush1.xpose.msra.mxu0 0.0
        %179 = vmatprep.subr.mxu0 0.0
        %180 = vmatpush1.xpose.msra.mxu0 0.0
        %181 = vmatprep.subr.mxu0 0.0
        %182 = vmatpush1.xpose.msra.mxu0 0.0
        %183 = vmatprep.subr.mxu0 0.0
        %184 = vmatpush1.xpose.msra.mxu0 0.0
        %185 = vmatprep.subr.mxu0 0.0
        %186 = vmatpush1.xpose.msra.mxu0 0.0
        %187 = vmatprep.subr.mxu0 0.0
        %188 = vmatpush1.xpose.msra.mxu0 0.0
        %189 = vmatprep.subr.mxu0 0.0
        %190 = vmatpush1.xpose.msra.mxu0 0.0
        %191 = vmatprep.subr.mxu0 0.0
        %192 = vmatpush1.xpose.msra.mxu0 0.0
        %193 = vmatprep.subr.mxu0 0.0
        %194 = vmatpush1.xpose.msra.mxu0 0.0
        %195 = vmatprep.subr.mxu0 0.0
        %196 = vmatpush1.xpose.msra.mxu0 0.0
        %197 = vmatprep.subr.mxu0 0.0
        %198 = vmatpush1.xpose.msra.mxu0 0.0
        %199 = vmatprep.subr.mxu0 0.0
        %200 = vmatpush1.xpose.msra.mxu0 0.0
        %201 = vmatprep.subr.mxu0 0.0
        %202 = vmatpush1.xpose.msra.mxu0 0.0
        %203 = vmatprep.subr.mxu0 0.0
        %204 = vmatpush1.xpose.msra.mxu0 0.0
        %205 = vmatprep.subr.mxu0 0.0
        %206 = vmatpush1.xpose.msra.mxu0 0.0
        %207 = vmatprep.subr.mxu0 0.0
        %208 = vmatpush1.xpose.msra.mxu0 0.0
        %209 = vmatprep.subr.mxu0 0.0
        %210 = vmatpush1.xpose.msra.mxu0 0.0
        %211 = vmatprep.subr.mxu0 0.0
        %212 = vmatpush1.xpose.msra.mxu0 0.0
        %213 = vmatprep.subr.mxu0 0.0
        %214 = vmatpush1.xpose.msra.mxu0 0.0
        %215 = vmatprep.subr.mxu0 0.0
        %216 = vmatpush1.xpose.msra.mxu0 0.0
        %217 = vmatprep.subr.mxu0 0.0
        %218 = vmatpush1.xpose.msra.mxu0 0.0
        %219 = vmatprep.subr.mxu0 0.0
        %220 = vmatpush1.xpose.msra.mxu0 0.0
        %221 = vmatprep.subr.mxu0 0.0
        %222 = vmatpush1.xpose.msra.mxu0 0.0
        %223 = vmatprep.subr.mxu0 0.0
        %224 = vmatpush1.xpose.msra.mxu0 0.0
        %225 = vmatprep.subr.mxu0 0.0
        %226 = vmatpush1.xpose.msra.mxu0 0.0
        %227 = vmatprep.subr.mxu0 0.0
        %228 = vmatpush1.xpose.msra.mxu0 0.0
        %229 = vmatprep.subr.mxu0 0.0
        %230 = vmatpush1.xpose.msra.mxu0 0.0
        %231 = vmatprep.subr.mxu0 0.0
        %232 = vmatpush1.xpose.msra.mxu0 0.0
        %233 = vmatprep.mubr.f32.mxu0 0.0
        %234 = vmatmul.mubr.f32.gmra.mrb[0].mxu0 %v167
        %v235 = vpop.f32.mrb[0].mxu0
        %v236 = vadd.f32 0.0, %v235
        %v237 = vpop.f32.mrb[0].mxu0
        %238 = vdwg.mxu0
        %v239 = vadd.f32 %v168, %v236
        %vm240 = vcmask 27648
        %241 = vst.msk [vmem:[#allocation2] sm:$0xf] %vm240, %v239
        %p242 = scmp.eq.s32.totalorder %s24, 1
        %p243 = pnand %p242, %p160
        %p244 = pneg %p243
        // Predicated region
        $region33: #{tpu_custom_call.1} parent=23 // pred_check
          _
        $region34: #{tpu_custom_call.1} parent=23 // pred_check_branch
          %246 = sbr.rel (%p243) target = $region36
        $region35: #{tpu_custom_call.1} parent=23 // pred_region
          %v247 = vld [vmem:[#allocation2] sm:$0xf]
          %v248 = vmul.f32 %v247, 0.5
          %249 = vst.msk [vmem:[%s157] sm:$0xf] %vm240, %v248
        $region36: #{tpu_custom_call.1} parent=23 // pred_fallthru
          _
        %s250 = sand.u32 %s75, 1
        %s251 = scalar_lea.sflag [#allocation5], %s250
        %s252 = sand.u32 %s75, 1
        %s253 = smul.addr %s252, 4
        %s254 = scalar_lea.vmem [#allocation6], %s253
        // Predicated region
        $region37: #{tpu_custom_call.1} parent=23 // pred_check
          %p255 = pneg %p85
        $region38: #{tpu_custom_call.1} parent=23 // pred_check_branch
          %257 = sbr.rel (%p255) target = $region40
        $region39: #{tpu_custom_call.1} parent=23 // pred_region
          %s259 = ssub.s32 64, 64
          %260 = vsyncadd %s251, %s259
          %s261 = smul.addr %s23, 64
          %s262 = scalar_lea.hbm %s1, %s261
          %s264 = sshll.u32 %s254, 4
          %s265 = int_to_ptr.vmem [resolvable:$true] %s264
          %267 = dma.vmem_to_hbm [thread:$0]  %s265, 64, %s262, %s251
        $region40: #{tpu_custom_call.1} parent=23 // pred_fallthru
          _
      $region24: #{tpu_custom_call.1} parent=5 // pred_fallthru
        _
      %p268 = scmp.le.s32.totalorder 2, %s13
      // Predicated region
      $region41: #{tpu_custom_call.1} parent=5 // pred_check
        %p269 = pneg %p268
      $region42: #{tpu_custom_call.1} parent=5 // pred_check_branch
        %271 = sbr.rel (%p269) target = $region44
      $region43: #{tpu_custom_call.1} parent=5 // pred_region
        %s272 = ssub.s32 %s13, 2
        // Predicated region
        $region45: #{tpu_custom_call.1} parent=43 // pred_check
          %p273 = pneg %p91
        $region46: #{tpu_custom_call.1} parent=43 // pred_check_branch
          %275 = sbr.rel (%p273) target = $region48
        $region47: #{tpu_custom_call.1} parent=43 // pred_region
          %s276 = sand.u32 %s76, 1
          %s277 = scalar_lea.sflag [#allocation5], %s276
          %s278 = sand.u32 %s76, 1
          %s279 = smul.addr %s278, 4
          %s280 = scalar_lea.vmem [#allocation6], %s279
          %281 = dma.done %s277, 64
        $region48: #{tpu_custom_call.1} parent=43 // pred_fallthru
          _
      $region44: #{tpu_custom_call.1} parent=5 // pred_fallthru
        _
    $region6: #{tpu_custom_call.1} parent=1 // loop_footer
      %s17 = sadd.s32 1, %s13
    $region7: #{tpu_custom_call.1} parent=1 // loop_footer_branch
      %12 = sbr.rel target = $region3
    $region8: #{tpu_custom_call.1} parent=1 // loop_exit
      _
    %282 = vsyncpa [#allocation4], 1
    %s283 = scalar_lea.sflag [#allocation4], 1
    %284 = vsyncpa %s283, 1
    %285 = vsyncpa [#allocation5], 1
    %s286 = scalar_lea.sflag [#allocation5], 1
    %287 = vsyncpa %s286, 1

</llo_original>
